<compile_context>
chip_gen: v7x
topology: tpu7x:2x2x1
jax: 0.10.0
libtpu: 0.0.40
codegen_flags: <defaults>
</compile_context>

<pallas_src>
import functools

import jax
import jax.numpy as jnp
import numpy as np
from jax.experimental import pallas as pl
from jax.experimental.pallas import tpu as pltpu


def hoaf_kernel(x_ref, wc_ref, bc_ref, o_ref):
    # x_ref / o_ref: (nb, C, T) -- channels on sublanes, pixels on lanes.
    # wc_ref: (C, C) collapsed conv (beta folded), bc_ref: (C, 1) f32 bias.
    w = wc_ref[...]
    b = bc_ref[...]
    # nb is a small compile-time constant -> unrolled Python loop.
    for i in range(x_ref.shape[0]):
        x = x_ref[i]                                            # (C, T)
        y = jnp.dot(w, x, preferred_element_type=jnp.float32) + b
        # residual add in f32, then cast to the I/O dtype
        o_ref[i] = (x.astype(jnp.float32) + y).astype(o_ref.dtype)


def _block_diag(blocks):
    """(G, a, b) per-group blocks -> dense (G*a, G*b) block-diagonal matrix."""
    G, a, b = blocks.shape
    eye = jnp.eye(G, dtype=blocks.dtype)
    return jnp.einsum('gab,gh->gahb', blocks, eye).reshape(G * a, G * b)


def _plan_blocks(n, c, hw, itemsize, target_bytes=1 << 20, max_block_bytes=2 << 20):
    """Pick (nb, tile_hw): nb images and tile_hw pixels per grid step.

    Aims for ~1 MiB activation blocks (cap 2 MiB -> <= ~8 MiB double-buffered
    in+out, safe on every generation's default scoped VMEM), lane-dense tiles
    (multiple of 128 or the full H*W dim), and >= 2 grid blocks when free.
    """
    col_bytes = c * itemsize
    max_lanes = max(128, (max_block_bytes // col_bytes) // 128 * 128)

    if hw <= max_lanes:
        tile_hw = hw                      # full last dim: always a legal block
    else:
        # Prefer a dividing multiple-of-128 tile close to max_lanes; otherwise
        # take max_lanes and let Pallas mask the ragged last block (the op is
        # purely column-wise, so OOB lanes never leak into valid outputs).
        tile_hw = max_lanes
        cand = min(max_lanes, (hw // 128) * 128)
        floor = max(128, max_lanes // 2)
        while cand >= floor:
            if hw % cand == 0:
                tile_hw = cand
                break
            cand -= 128

    n_hw_blocks = pl.cdiv(hw, tile_hw)
    block_bytes = c * tile_hw * itemsize

    # Batch several images per step when one image's pixels are too few.
    nb = 1
    if block_bytes < target_bytes and n > 1:
        want = min(n, max(1, target_bytes // block_bytes))
        for d in range(int(want), 0, -1):
            if n % d == 0:
                nb = d
                break
    # v7x has 2 TensorCores sharing the grid: keep >= 2 blocks when halving
    # nb is free.
    while nb > 1 and (n // nb) * n_hw_blocks < 2 and nb % 2 == 0:
        nb //= 2
    return nb, tile_hw


@functools.partial(jax.jit, static_argnames=("num_groups", "io_dtype"))
def hoaf_baseline_pallas(inp_nchw, w1, b1, w2, b2, beta2, *,
                         num_groups, io_dtype=jnp.float32):
    """inp_nchw: (N, C, H, W).
    w1: (G, oc2, cpg)  b1: (G*oc2,)   -- conv1 (grouped 1x1) params
    w2: (G, cpg, oc2)  b2: (C,)       -- conv2 (grouped 1x1) params
    beta2: (1, C, 1, 1)
    io_dtype: dtype of the activation HBM<->VMEM traffic (f32 exact, bf16
              halves bytes on this HBM-bound op); accumulation and the
              residual add are always f32.
    """
    N, C, H, W = inp_nchw.shape
    G = num_groups
    cpg = C // G
    oc2 = cpg * (cpg + 1) // 2
    M = oc2 * G
    HW = H * W

    # --- host glue: collapse conv2(conv1(.)) * beta2 into one C x C op ------
    f32 = jnp.float32
    beta_vec = beta2.reshape(C).astype(f32)
    W1T = _block_diag(w1.astype(f32))                              # (M, C)
    W2T = _block_diag(w2.astype(f32))                              # (C, M)
    Wc = (beta_vec[:, None] * W2T) @ W1T                           # (C, C)
    bc = (beta_vec * (W2T @ b1.astype(f32).reshape(M)
                      + b2.astype(f32))).reshape(C, 1)             # (C, 1)

    # Match MXU operand dtypes (bf16 x bf16 single-pass when io is bf16).
    w_dtype = jnp.bfloat16 if io_dtype == jnp.bfloat16 else jnp.float32
    Wc = Wc.astype(w_dtype)

    itemsize = jnp.dtype(io_dtype).itemsize
    nb, tile_hw = _plan_blocks(N, C, HW, itemsize)

    # NCHW-native view: free reshape, channels on sublanes / pixels on lanes.
    x = inp_nchw.reshape(N, C, HW).astype(io_dtype)

    grid = (pl.cdiv(N, nb), pl.cdiv(HW, tile_hw))
    out = pl.pallas_call(
        hoaf_kernel,
        out_shape=jax.ShapeDtypeStruct((N, C, HW), io_dtype),
        grid_spec=pltpu.PrefetchScalarGridSpec(
            num_scalar_prefetch=0,
            grid=grid,
            in_specs=[
                pl.BlockSpec((nb, C, tile_hw), lambda b, t: (b, 0, t)),  # x
                pl.BlockSpec((C, C), lambda b, t: (0, 0)),               # Wc
                pl.BlockSpec((C, 1), lambda b, t: (0, 0)),               # bc
            ],
            out_specs=pl.BlockSpec((nb, C, tile_hw), lambda b, t: (b, 0, t)),
        ),
        compiler_params=pltpu.CompilerParams(
            dimension_semantics=("parallel", "parallel")),
    )(x, Wc, bc)

    return out.reshape(N, C, H, W)


def hoaf_reference(inp_nchw, w1, b1, w2, b2, beta2, num_groups):
    """Pure-JAX grouped reference (mirrors the PyTorch grouped 1x1 convs)."""
    N, C, H, W = inp_nchw.shape
    G = num_groups
    cpg = C // G
    oc2 = cpg * (cpg + 1) // 2
    x = inp_nchw.reshape(N, G, cpg, H, W)
    h = jnp.einsum('ngchw,goc->ngohw', x, w1) + b1.reshape(1, G, oc2, 1, 1)
    y = jnp.einsum('ngohw,gco->ngchw', h, w2) + b2.reshape(1, G, cpg, 1, 1)
    y = y.reshape(N, C, H, W)
    return inp_nchw + beta2 * y


if __name__ == "__main__":
    # Module config: num_groups=4, num_channels=16 -> ch_per_gp=4, oc2=10, M=40
    num_groups = 4
    num_channels = 16
    cpg = num_channels // num_groups
    oc2 = cpg * (cpg + 1) // 2
    N, H, W = 2, 16, 16

    key = jax.random.PRNGKey(0)
    k_x, k_w1, k_b1, k_w2, k_b2 = jax.random.split(key, 5)

    inp = jax.random.normal(k_x, (N, num_channels, H, W), jnp.float32)

    # Synthetic params (shapes match nn.Conv2d grouped 1x1 weights, regrouped)
    w1 = jax.random.normal(k_w1, (num_groups, oc2, cpg), jnp.float32) * 0.1
    b1 = jax.random.normal(k_b1, (num_groups * oc2,), jnp.float32) * 0.1
    w2 = jax.random.normal(k_w2, (num_groups, cpg, oc2), jnp.float32) * 0.1
    b2 = jax.random.normal(k_b2, (num_channels,), jnp.float32) * 0.1
    beta2 = jnp.ones((1, num_channels, 1, 1), jnp.float32)   # torch.ones init

    ref = hoaf_reference(inp, w1, b1, w2, b2, beta2, num_groups)

    # f32 I/O path: exact module semantics, tight tolerance.
    out_f32 = hoaf_baseline_pallas(inp, w1, b1, w2, b2, beta2,
                                   num_groups=num_groups)
    out_f32 = jax.block_until_ready(out_f32)
    np.testing.assert_allclose(np.asarray(out_f32), np.asarray(ref),
                               rtol=1e-5, atol=1e-5)

    # bf16 activation-I/O path: halves HBM traffic on this mem-bound op
    # (bf16 x bf16 MXU with f32 accumulation + f32 residual add in-kernel).
    out_bf16 = hoaf_baseline_pallas(inp, w1, b1, w2, b2, beta2,
                                    num_groups=num_groups,
                                    io_dtype=jnp.bfloat16)
    out_bf16 = jax.block_until_ready(out_bf16)
    np.testing.assert_allclose(np.asarray(out_bf16).astype(np.float32),
                               np.asarray(ref), rtol=2e-2, atol=2e-2)

    print("KERNEL_OK")
</pallas_src>

<mosaic_0001>
module attributes {stable_mosaic.version = 11 : i64} {
  func.func @hoaf_kernel(%arg0: i32, %arg1: i32, %arg2: memref<1x16x256xf32, #tpu.memory_space<vmem>>, %arg3: memref<16x16xf32, #tpu.memory_space<vmem>>, %arg4: memref<16x1xf32, #tpu.memory_space<vmem>>, %arg5: memref<1x16x256xf32, #tpu.memory_space<vmem>>) attributes {dimension_semantics = [#tpu.dimension_semantics<parallel>, #tpu.dimension_semantics<parallel>], iteration_bounds = array<i64: 2, 1>, scalar_prefetch = 0 : i64, scratch_operands = 0 : i64, tpu.core_type = #tpu.core_type<tc>, window_params = [{transform_indices = @transform_0, window_bounds = array<i64: 1, 16, 256>}, {pipeline_mode = #tpu.pipeline_mode<synchronous>, transform_indices = @transform_1, window_bounds = array<i64: 16, 16>}, {pipeline_mode = #tpu.pipeline_mode<synchronous>, transform_indices = @transform_2, window_bounds = array<i64: 16, 1>}, {transform_indices = @transform_3, window_bounds = array<i64: 1, 16, 256>}]} {
    %c0 = arith.constant 0 : index
    %c0_0 = arith.constant 0 : index
    %0 = vector.load %arg3[%c0, %c0_0] : memref<16x16xf32, #tpu.memory_space<vmem>>, vector<16x16xf32>
    %c0_1 = arith.constant 0 : index
    %c0_2 = arith.constant 0 : index
    %1 = vector.load %arg4[%c0_1, %c0_2] : memref<16x1xf32, #tpu.memory_space<vmem>>, vector<16x1xf32>
    %c0_3 = arith.constant 0 : index
    %c0_4 = arith.constant 0 : index
    %c0_5 = arith.constant 0 : index
    %2 = vector.load %arg2[%c0_3, %c0_4, %c0_5] : memref<1x16x256xf32, #tpu.memory_space<vmem>>, vector<1x16x256xf32>
    %3 = vector.shape_cast %2 : vector<1x16x256xf32> to vector<16x256xf32>
    %cst = arith.constant dense<0.000000e+00> : vector<16x256xf32>
    %4 = tpu.matmul %0, %3, %cst {dimension_numbers = #tpu.dot_dimension_numbers<[1], [0], [0], [1], [0, 0, 1, 1], [], []>} : vector<16x16xf32>, vector<16x256xf32>, vector<16x256xf32> -> vector<16x256xf32>
    %5 = vector.broadcast %1 : vector<16x1xf32> to vector<16x256xf32>
    %6 = arith.addf %4, %5 : vector<16x256xf32>
    %7 = arith.addf %3, %6 : vector<16x256xf32>
    %c0_6 = arith.constant 0 : index
    %c0_7 = arith.constant 0 : index
    %c0_8 = arith.constant 0 : index
    %8 = vector.load %arg5[%c0_6, %c0_7, %c0_8] : memref<1x16x256xf32, #tpu.memory_space<vmem>>, vector<1x16x256xf32>
    %9 = vector.shape_cast %8 : vector<1x16x256xf32> to vector<16x256xf32>
    %10 = vector.shape_cast %7 : vector<16x256xf32> to vector<1x16x256xf32>
    tpu.vector_store %arg5[%c0_6, %c0_7, %c0_8], %10 {strides = array<i32>} : memref<1x16x256xf32, #tpu.memory_space<vmem>>, vector<1x16x256xf32>,
    return
  }
  func.func @transform_0(%arg0: i32, %arg1: i32) -> (i32, i32, i32) {
    %c0_i32 = arith.constant 0 : i32
    %c0_i32_0 = arith.constant 0 : i32
    return %arg0, %c0_i32, %arg1 : i32, i32, i32
  }
  func.func @transform_1(%arg0: i32, %arg1: i32) -> (i32, i32) {
    %c0_i32 = arith.constant 0 : i32
    %c0_i32_0 = arith.constant 0 : i32
    %c0_i32_1 = arith.constant 0 : i32
    return %c0_i32, %c0_i32_0 : i32, i32
  }
  func.func @transform_2(%arg0: i32, %arg1: i32) -> (i32, i32) {
    %c0_i32 = arith.constant 0 : i32
    %c0_i32_0 = arith.constant 0 : i32
    %c0_i32_1 = arith.constant 0 : i32
    return %c0_i32, %c0_i32_0 : i32, i32
  }
  func.func @transform_3(%arg0: i32, %arg1: i32) -> (i32, i32, i32) {
    %c0_i32 = arith.constant 0 : i32
    %c0_i32_0 = arith.constant 0 : i32
    return %arg0, %c0_i32, %arg1 : i32, i32, i32
  }
}

</mosaic_0001>

<llo_original>
// kernel: hoaf_baseline_pallas.1
$region0: #{hoaf_baseline_pallas.1}
  #allocation0 [shape = 'u32[]', space=smem, size = 0x4, offset = 0x4, fixed_abs, tag = 'smem constant byte address 0x4 - core index']
  #allocation1 [shape = 'u32[144,128]{1,0:T(1,128)}', space=vmem, size = 0x12000, scoped, tag = 'internal scratch']
  %s0 = inlined_call_operand.vmem [shape: f32[2,16,256], index: 0, kind: input, shape index: {}]
  %s1 = inlined_call_operand.vmem [shape: f32[16,16], index: 1, kind: input, shape index: {}]
  %s2 = inlined_call_operand.vmem [shape: f32[16,1], index: 2, kind: input, shape index: {}]
  %s3 = inlined_call_operand.vmem [shape: f32[2,16,256], index: 3, kind: output, shape index: {}]
  %s4 = sld [smem:[#allocation0]]
  $region45: #{hoaf_baseline_pallas.1} parent=0
    _
  %s6 = ssub.s32 1, %s4
  %s7 = scalar_select 0, %s6, %s4
  loop: start=0, step=1, limit=4
  $region2: #{hoaf_baseline_pallas.1} parent=0 // loop_pre_header
    _
  $region3: #{hoaf_baseline_pallas.1} parent=0 // loop_header
    %s9 = sphi 0, %s13
    %p10 = scmp.ge.s32.totalorder %s9, 4
    %s16 = sphi 0, %s28
    %s17 = sphi 0, %s24
    %s18 = sphi 0, %s16
    %s19 = sphi 0, %s17
    %s20 = sphi 0, %s18
    %s21 = sphi 0, %s19
    %s33 = sphi 0, %s35
    %s36 = sphi 0, %s33
    %s37 = sphi 0, %s36
    %s53 = sphi 0, %s37
    %s57 = sphi 0, %s57
    %s59 = sphi 0, %s57
    %s60 = sphi 0, %s59
    %s74 = sphi 0, %s60
    %s78 = sphi 0, %s78
    %s80 = sphi 0, %s78
    %s81 = sphi 0, %s80
    %s95 = sphi 0, %s81
    %s103 = sphi 0, %s105
    %s106 = sphi 0, %s103
    %s107 = sphi 0, %s106
    %s123 = sphi 0, %s107
  $region4: #{hoaf_baseline_pallas.1} parent=0 // loop_header_branch
    %12 = sbr.rel (%p10) target = $region8
  $region5: #{hoaf_baseline_pallas.1} parent=0 // loop_body
    %s14 = ssub.s32 %s9, 1
    %s15 = ssub.s32 %s9, 2
    %s22 = sadd.s32 1, %s17
    %p23 = scmp.ge.s32.totalorder %s22, 1
    %s24 = scalar_select %p23, 0, %s22
    %s25 = sadd.s32 1, %s16
    %s26 = scalar_select %p23, %s25, %s16
    %p27 = scmp.ge.s32.totalorder %s26, 2
    %s28 = scalar_select %p27, 0, %s26
    %s29 = ssub.s32 %s16, %s28
    %s30 = ssub.s32 %s17, %s24
    %s31 = sor.u32 %s29, %s30
    %p32 = scmp.eq.s32.totalorder %s31, 0
    %s34 = sadd.s32 %s33, 1
    %s35 = scalar_select %p32, %s33, %s34
    %p38 = pneg %p32
    %p39 = scmp.eq.s32.totalorder %s9, 1
    %p40 = por %p38, %p39
    %p41 = scmp.ne.s32.totalorder %s33, %s36
    %p42 = scmp.eq.s32.totalorder %s9, 0
    %p43 = por %p41, %p42
    %p44 = scmp.ne.s32.totalorder %s33, %s36
    %p45 = scmp.eq.s32.totalorder %s14, 1
    %p46 = por %p44, %p45
    %p47 = scmp.ne.s32.totalorder %s36, %s37
    %p48 = scmp.eq.s32.totalorder %s14, 0
    %p49 = por %p47, %p48
    %p50 = scmp.ne.s32.totalorder %s36, %s37
    %p51 = scmp.eq.s32.totalorder %s15, 1
    %p52 = por %p50, %p51
    %p54 = scmp.ne.s32.totalorder %s37, %s53
    %p55 = scmp.eq.s32.totalorder %s15, 0
    %p56 = por %p54, %p55
    %s58 = sadd.s32 %s57, 1
    %p61 = scmp.eq.s32.totalorder %s9, 1
    %p62 = scmp.ne.s32.totalorder %s57, %s59
    %p63 = scmp.eq.s32.totalorder %s9, 0
    %p64 = por %p62, %p63
    %p65 = scmp.ne.s32.totalorder %s57, %s59
    %p66 = scmp.eq.s32.totalorder %s14, 1
    %p67 = por %p65, %p66
    %p68 = scmp.ne.s32.totalorder %s59, %s60
    %p69 = scmp.eq.s32.totalorder %s14, 0
    %p70 = por %p68, %p69
    %p71 = scmp.ne.s32.totalorder %s59, %s60
    %p72 = scmp.eq.s32.totalorder %s15, 1
    %p73 = por %p71, %p72
    %p75 = scmp.ne.s32.totalorder %s60, %s74
    %p76 = scmp.eq.s32.totalorder %s15, 0
    %p77 = por %p75, %p76
    %s79 = sadd.s32 %s78, 1
    %p82 = scmp.eq.s32.totalorder %s9, 1
    %p83 = scmp.ne.s32.totalorder %s78, %s80
    %p84 = scmp.eq.s32.totalorder %s9, 0
    %p85 = por %p83, %p84
    %p86 = scmp.ne.s32.totalorder %s78, %s80
    %p87 = scmp.eq.s32.totalorder %s14, 1
    %p88 = por %p86, %p87
    %p89 = scmp.ne.s32.totalorder %s80, %s81
    %p90 = scmp.eq.s32.totalorder %s14, 0
    %p91 = por %p89, %p90
    %p92 = scmp.ne.s32.totalorder %s80, %s81
    %p93 = scmp.eq.s32.totalorder %s15, 1
    %p94 = por %p92, %p93
    %p96 = scmp.ne.s32.totalorder %s81, %s95
    %p97 = scmp.eq.s32.totalorder %s15, 0
    %p98 = por %p96, %p97
    %s99 = ssub.s32 %s16, %s28
    %s100 = ssub.s32 %s17, %s24
    %s101 = sor.u32 %s99, %s100
    %p102 = scmp.eq.s32.totalorder %s101, 0
    %s104 = sadd.s32 %s103, 1
    %s105 = scalar_select %p102, %s103, %s104
    %p108 = pneg %p102
    %p109 = scmp.eq.s32.totalorder %s9, 1
    %p110 = por %p108, %p109
    %p111 = scmp.ne.s32.totalorder %s103, %s106
    %p112 = scmp.eq.s32.totalorder %s9, 0
    %p113 = por %p111, %p112
    %p114 = scmp.ne.s32.totalorder %s103, %s106
    %p115 = scmp.eq.s32.totalorder %s14, 1
    %p116 = por %p114, %p115
    %p117 = scmp.ne.s32.totalorder %s106, %s107
    %p118 = scmp.eq.s32.totalorder %s14, 0
    %p119 = por %p117, %p118
    %p120 = scmp.ne.s32.totalorder %s106, %s107
    %p121 = scmp.eq.s32.totalorder %s15, 1
    %p122 = por %p120, %p121
    %p124 = scmp.ne.s32.totalorder %s107, %s123
    %p125 = scmp.eq.s32.totalorder %s15, 0
    %p126 = por %p124, %p125
    %p127 = scmp.le.s32.totalorder 1, %s9
    %p128 = scmp.lt.s32.totalorder %s9, 3
    %p129 = pnand %p127, %p128
    %p130 = pneg %p129
    // Predicated region
    $region9: #{hoaf_baseline_pallas.1} parent=5 // pred_check
      _
    $region10: #{hoaf_baseline_pallas.1} parent=5 // pred_check_branch
      %132 = sbr.rel (%p129) target = $region12
    $region11: #{hoaf_baseline_pallas.1} parent=5 // pred_region
      %s133 = ssub.s32 %s9, 1
      // Predicated region
      $region13: #{hoaf_baseline_pallas.1} parent=11 // pred_check
        %p134 = pneg %p70
      $region14: #{hoaf_baseline_pallas.1} parent=11 // pred_check_branch
        %136 = sbr.rel (%p134) target = $region16
      $region15: #{hoaf_baseline_pallas.1} parent=11 // pred_region
        _
      $region16: #{hoaf_baseline_pallas.1} parent=11 // pred_fallthru
        _
      // Predicated region
      $region17: #{hoaf_baseline_pallas.1} parent=11 // pred_check
        %p137 = pneg %p91
      $region18: #{hoaf_baseline_pallas.1} parent=11 // pred_check_branch
        %139 = sbr.rel (%p137) target = $region20
      $region19: #{hoaf_baseline_pallas.1} parent=11 // pred_region
        _
      $region20: #{hoaf_baseline_pallas.1} parent=11 // pred_fallthru
        _
    $region12: #{hoaf_baseline_pallas.1} parent=5 // pred_fallthru
      _
    %p140 = scmp.lt.s32.totalorder %s9, 2
    // Predicated region
    $region21: #{hoaf_baseline_pallas.1} parent=5 // pred_check
      %p141 = pneg %p140
    $region22: #{hoaf_baseline_pallas.1} parent=5 // pred_check_branch
      %143 = sbr.rel (%p141) target = $region24
    $region23: #{hoaf_baseline_pallas.1} parent=5 // pred_region
      // Predicated region
      $region25: #{hoaf_baseline_pallas.1} parent=23 // pred_check
        %p144 = pneg %p43
      $region26: #{hoaf_baseline_pallas.1} parent=23 // pred_check_branch
        %146 = sbr.rel (%p144) target = $region28
      $region27: #{hoaf_baseline_pallas.1} parent=23 // pred_region
        %s147 = smul.u32 2, %s17
        %p148 = scmp.lt.s32.totalorder %s16, 1
        %s149 = scalar_select %p148, %s16, 1
        %p150 = scmp.lt.s32.totalorder %s147, 1
        %s151 = scalar_select %p150, %s147, 1
        %s152 = smul.addr %s149, 4
        %s153 = sadd.s32 %s151, %s152
        %s154 = smul.addr %s153, 8
        %s155 = scalar_lea.vmem %s0, %s154
        %s156 = smul.u32 2, %s17
      $region28: #{hoaf_baseline_pallas.1} parent=23 // pred_fallthru
        _
    $region24: #{hoaf_baseline_pallas.1} parent=5 // pred_fallthru
      _
    %p157 = scmp.le.s32.totalorder 1, %s9
    %p158 = scmp.lt.s32.totalorder %s9, 3
    %p159 = pnand %p157, %p158
    %p160 = pneg %p159
    // Predicated region
    $region29: #{hoaf_baseline_pallas.1} parent=5 // pred_check
      _
    $region30: #{hoaf_baseline_pallas.1} parent=5 // pred_check_branch
      %162 = sbr.rel (%p159) target = $region32
    $region31: #{hoaf_baseline_pallas.1} parent=5 // pred_region
      %s163 = ssub.s32 %s9, 1
      %s164 = smul.u32 2, %s19
      %p165 = scmp.lt.s32.totalorder %s18, 1
      %s166 = scalar_select %p165, %s18, 1
      %p167 = scmp.lt.s32.totalorder %s164, 1
      %s168 = scalar_select %p167, %s164, 1
      %s169 = smul.addr %s166, 4
      %s170 = sadd.s32 %s168, %s169
      %s171 = smul.addr %s170, 8
      %s172 = scalar_lea.vmem %s0, %s171
      %p173 = pneg %p49
      %p174 = pneg %p46
      %p175 = pneg %p70
      %p176 = pneg %p67
      %p177 = pneg %p91
      %p178 = pneg %p88
      %p179 = pneg %p119
      %p180 = pneg %p116
      %s181 = smul.u32 2, %s19
      %p182 = scmp.lt.s32.totalorder %s18, 1
      %s183 = scalar_select %p182, %s18, 1
      %p184 = scmp.lt.s32.totalorder %s181, 1
      %s185 = scalar_select %p184, %s181, 1
      %s186 = smul.addr %s183, 4
      %s187 = sadd.s32 %s185, %s186
      %s188 = smul.addr %s187, 8
      %s189 = scalar_lea.vmem %s3, %s188
      %s190 = smul.u32 2, %s19
      %p191 = scmp.lt.s32.totalorder %s18, 1
      %s192 = scalar_select %p191, %s18, 1
      %p193 = scmp.lt.s32.totalorder %s190, 1
      %s194 = scalar_select %p193, %s190, 1
      %s195 = smul.addr %s192, 4
      %s196 = sadd.s32 %s194, %s195
      %s197 = smul.addr %s196, 8
      %s198 = scalar_lea.vmem %s0, %s197
      %s199 = smul.u32 2, %s19
      %s200 = smul.u32 2, %s19
      %p201 = scmp.lt.s32.totalorder %s18, 1
      %s202 = scalar_select %p201, %s18, 1
      %p203 = scmp.lt.s32.totalorder %s200, 1
      %s204 = scalar_select %p203, %s200, 1
      %s205 = smul.addr %s202, 4
      %s206 = sadd.s32 %s204, %s205
      %s207 = smul.addr %s206, 8
      %s208 = scalar_lea.vmem %s3, %s207
      %s209 = smul.u32 2, %s19
      %v210 = vld [vmem:[%s1] sm:$0xff]
      %v211 = vld [vmem:[%s1 + $0x8] sm:$0xff]
      %v212 = vld [vmem:[%s2] sm:$0xff]
      %v213 = vld [vmem:[%s2 + $0x8] sm:$0xff]
      %v214 = vld [vmem:[%s198] sm:$0xff]
      %v215 = vld [vmem:[%s198 + $0x8] sm:$0xff]
      %v216 = vld [vmem:[%s198 + $0x10] sm:$0xff]
      %v217 = vld [vmem:[%s198 + $0x18] sm:$0xff]
      %219 = vset.pattern.permute.xlu0 0
      %220 = vperm.xlu0 %219, %v212
      %v221 = vpop.permute.xlu0 %220
      %224 = vset.pattern.permute.xlu0 0
      %225 = vperm.xlu0 %224, %v213
      %v226 = vpop.permute.xlu0 %225
      %vm228 = vcmask 130048
      %v230 = vsel %vm228, %v210, 0
      %v233 = vsel %vm228, %v211, 0
      %235 = vmatprep.subr.mxu0 %v215
      %236 = vmatpush1.msra.mxu0 %v214
      %237 = vmatprep.subr.mxu0 %v217
      %238 = vmatpush1.msra.mxu0 %v216
      %239 = vmatprep.subr.mxu0 0.0
      %240 = vmatpush1.msra.mxu0 0.0
      %241 = vmatprep.subr.mxu0 0.0
      %242 = vmatpush1.msra.mxu0 0.0
      %243 = vmatprep.subr.mxu0 0.0
      %244 = vmatpush1.msra.mxu0 0.0
      %245 = vmatprep.subr.mxu0 0.0
      %246 = vmatpush1.msra.mxu0 0.0
      %247 = vmatprep.subr.mxu0 0.0
      %248 = vmatpush1.msra.mxu0 0.0
      %249 = vmatprep.subr.mxu0 0.0
      %250 = vmatpush1.msra.mxu0 0.0
      %251 = vmatprep.subr.mxu0 0.0
      %252 = vmatpush1.msra.mxu0 0.0
      %253 = vmatprep.subr.mxu0 0.0
      %254 = vmatpush1.msra.mxu0 0.0
      %255 = vmatprep.subr.mxu0 0.0
      %256 = vmatpush1.msra.mxu0 0.0
      %257 = vmatprep.subr.mxu0 0.0
      %258 = vmatpush1.msra.mxu0 0.0
      %259 = vmatprep.subr.mxu0 0.0
      %260 = vmatpush1.msra.mxu0 0.0
      %261 = vmatprep.subr.mxu0 0.0
      %262 = vmatpush1.msra.mxu0 0.0
      %263 = vmatprep.subr.mxu0 0.0
      %264 = vmatpush1.msra.mxu0 0.0
      %265 = vmatprep.subr.mxu0 0.0
      %266 = vmatpush1.msra.mxu0 0.0
      %267 = vmatprep.subr.mxu0 0.0
      %268 = vmatpush1.msra.mxu0 0.0
      %269 = vmatprep.subr.mxu0 0.0
      %270 = vmatpush1.msra.mxu0 0.0
      %271 = vmatprep.subr.mxu0 0.0
      %272 = vmatpush1.msra.mxu0 0.0
      %273 = vmatprep.subr.mxu0 0.0
      %274 = vmatpush1.msra.mxu0 0.0
      %275 = vmatprep.subr.mxu0 0.0
      %276 = vmatpush1.msra.mxu0 0.0
      %277 = vmatprep.subr.mxu0 0.0
      %278 = vmatpush1.msra.mxu0 0.0
      %279 = vmatprep.subr.mxu0 0.0
      %280 = vmatpush1.msra.mxu0 0.0
      %281 = vmatprep.subr.mxu0 0.0
      %282 = vmatpush1.msra.mxu0 0.0
      %283 = vmatprep.subr.mxu0 0.0
      %284 = vmatpush1.msra.mxu0 0.0
      %285 = vmatprep.subr.mxu0 0.0
      %286 = vmatpush1.msra.mxu0 0.0
      %287 = vmatprep.subr.mxu0 0.0
      %288 = vmatpush1.msra.mxu0 0.0
      %289 = vmatprep.subr.mxu0 0.0
      %290 = vmatpush1.msra.mxu0 0.0
      %291 = vmatprep.subr.mxu0 0.0
      %292 = vmatpush1.msra.mxu0 0.0
      %293 = vmatprep.subr.mxu0 0.0
      %294 = vmatpush1.msra.mxu0 0.0
      %295 = vmatprep.subr.mxu0 0.0
      %296 = vmatpush1.msra.mxu0 0.0
      %297 = vmatprep.subr.mxu0 0.0
      %298 = vmatpush1.msra.mxu0 0.0
      %299 = vmatprep.mubr.f32.mxu0 0.0
      %300 = vmatmul.mubr.f32.gmra.mrb[0].mxu0 %v230
      %v301 = vpop.f32.mrb[0].mxu0
      %v302 = vadd.f32 %v221, %v301
      %v303 = vpop.f32.mrb[0].mxu0
      %v304 = vadd.f32 %v221, %v303
      %305 = vmatprep.mubr.f32.mxu0 0.0
      %306 = vmatmul.mubr.f32.gmra.mrb[0].mxu0 %v233
      %v307 = vpop.f32.mrb[0].mxu0
      %v308 = vadd.f32 %v226, %v307
      %v309 = vpop.f32.mrb[0].mxu0
      %v310 = vadd.f32 %v226, %v309
      %311 = vdwg.mxu0
      %v312 = vadd.f32 %v214, %v302
      %v313 = vadd.f32 %v215, %v304
      %v314 = vadd.f32 %v216, %v308
      %v315 = vadd.f32 %v217, %v310
      %316 = vst [vmem:[%s208] sm:$0xff] %v312
      %317 = vst [vmem:[%s208 + $0x8] sm:$0xff] %v313
      %318 = vst [vmem:[%s208 + $0x10] sm:$0xff] %v314
      %319 = vst [vmem:[%s208 + $0x18] sm:$0xff] %v315
      %s320 = smul.u32 2, %s19
      %p321 = scmp.lt.s32.totalorder %s18, 1
      %s322 = scalar_select %p321, %s18, 1
      %p323 = scmp.lt.s32.totalorder %s320, 1
      %s324 = scalar_select %p323, %s320, 1
      %s325 = smul.addr %s322, 4
      %s326 = sadd.s32 %s324, %s325
      %s327 = smul.addr %s326, 8
      %s328 = scalar_lea.vmem %s3, %s327
      // Predicated region
      $region33: #{hoaf_baseline_pallas.1} parent=31 // pred_check
        %p329 = pneg %p116
      $region34: #{hoaf_baseline_pallas.1} parent=31 // pred_check_branch
        %331 = sbr.rel (%p329) target = $region36
      $region35: #{hoaf_baseline_pallas.1} parent=31 // pred_region
        %s332 = smul.u32 2, %s19
      $region36: #{hoaf_baseline_pallas.1} parent=31 // pred_fallthru
        _
    $region32: #{hoaf_baseline_pallas.1} parent=5 // pred_fallthru
      _
    %p333 = scmp.le.s32.totalorder 2, %s9
    // Predicated region
    $region37: #{hoaf_baseline_pallas.1} parent=5 // pred_check
      %p334 = pneg %p333
    $region38: #{hoaf_baseline_pallas.1} parent=5 // pred_check_branch
      %336 = sbr.rel (%p334) target = $region40
    $region39: #{hoaf_baseline_pallas.1} parent=5 // pred_region
      %s337 = ssub.s32 %s9, 2
      // Predicated region
      $region41: #{hoaf_baseline_pallas.1} parent=39 // pred_check
        %p338 = pneg %p122
      $region42: #{hoaf_baseline_pallas.1} parent=39 // pred_check_branch
        %340 = sbr.rel (%p338) target = $region44
      $region43: #{hoaf_baseline_pallas.1} parent=39 // pred_region
        %s341 = smul.u32 2, %s21
        %p342 = scmp.lt.s32.totalorder %s20, 1
        %s343 = scalar_select %p342, %s20, 1
        %p344 = scmp.lt.s32.totalorder %s341, 1
        %s345 = scalar_select %p344, %s341, 1
        %s346 = smul.addr %s343, 4
        %s347 = sadd.s32 %s345, %s346
        %s348 = smul.addr %s347, 8
        %s349 = scalar_lea.vmem %s3, %s348
      $region44: #{hoaf_baseline_pallas.1} parent=39 // pred_fallthru
        _
    $region40: #{hoaf_baseline_pallas.1} parent=5 // pred_fallthru
      _
  $region6: #{hoaf_baseline_pallas.1} parent=0 // loop_footer
    %s13 = sadd.s32 1, %s9
  $region7: #{hoaf_baseline_pallas.1} parent=0 // loop_footer_branch
    %8 = sbr.rel target = $region3
  $region8: #{hoaf_baseline_pallas.1} parent=0 // loop_exit
    _

</llo_original>
